<compile_context>
chip_gen: v5e
topology: v5e:2x2
jax: 0.10.0
libtpu: 0.0.40
codegen_flags: <defaults>
</compile_context>

<pallas_src>
import jax
import jax.numpy as jnp
from jax.experimental import pallas as pl
from jax.experimental.pallas import tpu as pltpu


def ffnn_kernel(x_ref, w1_ref, b1_ref, w2_ref, b2_ref, w3_ref, b3_ref, o_ref):
    # ---- Layer 1: Linear + ReLU (bf16 inputs, f32 MXU accumulation) ------
    a = jnp.dot(x_ref[...], w1_ref[...], preferred_element_type=jnp.float32)
    a = a + b1_ref[...]
    b = jnp.maximum(a, 0.0)                            # nn.ReLU

    # ---- Layer 2: Linear + LeakyReLU (negative_slope = 0.01) -------------
    c = jnp.dot(b.astype(w2_ref.dtype), w2_ref[...],
                preferred_element_type=jnp.float32)
    c = c + b2_ref[...]
    d = jnp.where(c > 0.0, c, 0.01 * c)                # nn.LeakyReLU

    # ---- Layer 3: Linear + LogSoftmax over last dim (all f32) ------------
    e = jnp.dot(d.astype(w3_ref.dtype), w3_ref[...],
                preferred_element_type=jnp.float32)
    e = e + b3_ref[...]
    m = jnp.max(e, axis=-1, keepdims=True)
    z = e - m
    lse = jnp.log(jnp.sum(jnp.exp(z), axis=-1, keepdims=True))
    o_ref[...] = (z - lse).astype(o_ref.dtype)         # nn.LogSoftmax


def ffnn_forward(x, w1, b1, w2, b2, w3, b3, *, tile_b=512,
                 compute_dtype=jnp.bfloat16):
    B, in_dim = x.shape
    d1 = w1.shape[1]
    d2 = w2.shape[1]
    out_dim = w3.shape[1]

    # Cast the dominant HBM stream (x) and the weights to bf16; biases and
    # all elementwise / softmax math stay f32.
    xc = x.astype(compute_dtype)
    w1c, w2c, w3c = (w.astype(compute_dtype) for w in (w1, w2, w3))
    b1c, b2c, b3c = (b.astype(jnp.float32) for b in (b1, b2, b3))

    # Batch tile: if the whole batch fits in one tile, use the full batch
    # (block == full dim is always legal); otherwise tile_b (multiple of 8).
    tb = B if B <= tile_b else tile_b
    grid = (pl.cdiv(B, tb),)

    def resident(shape):
        # Constant block index across the grid -> stays VMEM-resident.
        nd = len(shape)
        return pl.BlockSpec(shape, lambda i, _nd=nd: (0,) * _nd)

    grid_spec = pltpu.PrefetchScalarGridSpec(
        num_scalar_prefetch=0,
        grid=grid,
        in_specs=[
            pl.BlockSpec((tb, in_dim), lambda i: (i, 0)),   # x: batch-tiled
            resident(w1c.shape), resident(b1c.shape),
            resident(w2c.shape), resident(b2c.shape),
            resident(w3c.shape), resident(b3c.shape),
        ],
        out_specs=pl.BlockSpec((tb, out_dim), lambda i: (i, 0)),
    )

    itemsize = jnp.dtype(compute_dtype).itemsize
    flops = 2 * B * (in_dim * d1 + d1 * d2 + d2 * out_dim)
    bytes_accessed = (
        B * in_dim * itemsize                                   # x stream
        + (in_dim * d1 + d1 * d2 + d2 * out_dim) * itemsize     # weights
        + (d1 + d2 + out_dim) * 4                               # biases (f32)
        + B * out_dim * 4                                       # output (f32)
    )
    cost = pl.CostEstimate(flops=flops,
                           transcendentals=B * out_dim,         # exp in softmax
                           bytes_accessed=bytes_accessed)

    return pl.pallas_call(
        ffnn_kernel,
        out_shape=jax.ShapeDtypeStruct((B, out_dim), jnp.float32),
        grid_spec=grid_spec,
        compiler_params=pltpu.CompilerParams(
            # "parallel" lets Mosaic shard batch tiles across v7x's 2 TCs.
            dimension_semantics=("parallel",),
            vmem_limit_bytes=32 * 1024 * 1024,
        ),
        cost_estimate=cost,
    )(xc, w1c, b1c, w2c, b2c, w3c, b3c)


def ffnn_reference(x, w1, b1, w2, b2, w3, b3, compute_dtype=jnp.bfloat16):
    """Pure-JAX reference mirroring the kernel's mixed-precision math."""
    cd = compute_dtype
    a = jnp.dot(x.astype(cd), w1.astype(cd),
                preferred_element_type=jnp.float32) + b1
    b = jnp.maximum(a, 0.0)
    c = jnp.dot(b.astype(cd), w2.astype(cd),
                preferred_element_type=jnp.float32) + b2
    d = jnp.where(c > 0.0, c, 0.01 * c)
    e = jnp.dot(d.astype(cd), w3.astype(cd),
                preferred_element_type=jnp.float32) + b3
    return jax.nn.log_softmax(e, axis=-1)


def init_linear_params(key, fan_in, fan_out):
    """Deterministic PyTorch-style (Kaiming-uniform-ish) init.

    Returns W of shape (fan_in, fan_out) (already transposed for x @ W) and
    bias of shape (1, fan_out).
    """
    kw, kb = jax.random.split(key)
    bound = 1.0 / jnp.sqrt(jnp.asarray(fan_in, jnp.float32))
    w = jax.random.uniform(kw, (fan_in, fan_out), jnp.float32, -bound, bound)
    b = jax.random.uniform(kb, (1, fan_out), jnp.float32, -bound, bound)
    return w, b


if __name__ == "__main__":
    # Small shapes consistent with FFNN(input_dim=32, d1=64, d2=32), out_dim=5.
    batch, input_dim, d1, d2, out_dim = 16, 32, 64, 32, 5

    key = jax.random.PRNGKey(0)
    kx, k1, k2, k3 = jax.random.split(key, 4)

    x = jax.random.normal(kx, (batch, input_dim), jnp.float32)
    w1, b1 = init_linear_params(k1, input_dim, d1)
    w2, b2 = init_linear_params(k2, d1, d2)
    w3, b3 = init_linear_params(k3, d2, out_dim)

    # tile_b=8 here so the small test exercises a multi-step batch grid
    # (grid=(2,)); production callers keep the default tile_b=512.
    out = ffnn_forward(x, w1, b1, w2, b2, w3, b3, tile_b=8)
    out = jax.block_until_ready(out)

    ref = ffnn_reference(x, w1, b1, w2, b2, w3, b3)
    assert out.shape == (batch, out_dim)
    assert jnp.allclose(out, ref, atol=1e-3, rtol=1e-3), "mismatch vs reference"
    # Rows of log-softmax must exp-sum to 1.
    assert jnp.allclose(jnp.sum(jnp.exp(out), axis=-1), 1.0, atol=1e-3)

    print("KERNEL_OK")
</pallas_src>

<mosaic_0001>
module attributes {stable_mosaic.version = 11 : i64} {
  func.func @ffnn_kernel(%arg0: i32, %arg1: memref<8x32xbf16, #tpu.memory_space<vmem>>, %arg2: memref<32x64xbf16, #tpu.memory_space<vmem>>, %arg3: memref<1x64xf32, #tpu.memory_space<vmem>>, %arg4: memref<64x32xbf16, #tpu.memory_space<vmem>>, %arg5: memref<1x32xf32, #tpu.memory_space<vmem>>, %arg6: memref<32x5xbf16, #tpu.memory_space<vmem>>, %arg7: memref<1x5xf32, #tpu.memory_space<vmem>>, %arg8: memref<8x5xf32, #tpu.memory_space<vmem>>) attributes {dimension_semantics = [#tpu.dimension_semantics<parallel>], iteration_bounds = array<i64: 2>, scalar_prefetch = 0 : i64, scratch_operands = 0 : i64, tpu.core_type = #tpu.core_type<tc>, window_params = [{transform_indices = @transform_0, window_bounds = array<i64: 8, 32>}, {pipeline_mode = #tpu.pipeline_mode<synchronous>, transform_indices = @transform_1, window_bounds = array<i64: 32, 64>}, {pipeline_mode = #tpu.pipeline_mode<synchronous>, transform_indices = @transform_2, window_bounds = array<i64: 1, 64>}, {pipeline_mode = #tpu.pipeline_mode<synchronous>, transform_indices = @transform_3, window_bounds = array<i64: 64, 32>}, {pipeline_mode = #tpu.pipeline_mode<synchronous>, transform_indices = @transform_4, window_bounds = array<i64: 1, 32>}, {pipeline_mode = #tpu.pipeline_mode<synchronous>, transform_indices = @transform_5, window_bounds = array<i64: 32, 5>}, {pipeline_mode = #tpu.pipeline_mode<synchronous>, transform_indices = @transform_6, window_bounds = array<i64: 1, 5>}, {transform_indices = @transform_7, window_bounds = array<i64: 8, 5>}]} {
    %c0 = arith.constant 0 : index
    %c0_0 = arith.constant 0 : index
    %0 = vector.load %arg1[%c0, %c0_0] : memref<8x32xbf16, #tpu.memory_space<vmem>>, vector<8x32xbf16>
    %c0_1 = arith.constant 0 : index
    %c0_2 = arith.constant 0 : index
    %1 = vector.load %arg2[%c0_1, %c0_2] : memref<32x64xbf16, #tpu.memory_space<vmem>>, vector<32x64xbf16>
    %cst = arith.constant dense<0.000000e+00> : vector<8x64xf32>
    %2 = tpu.matmul %0, %1, %cst {dimension_numbers = #tpu.dot_dimension_numbers<[1], [0], [0], [1], [0, 0, 1, 1], [], []>} : vector<8x32xbf16>, vector<32x64xbf16>, vector<8x64xf32> -> vector<8x64xf32>
    %c0_3 = arith.constant 0 : index
    %c0_4 = arith.constant 0 : index
    %3 = vector.load %arg3[%c0_3, %c0_4] : memref<1x64xf32, #tpu.memory_space<vmem>>, vector<1x64xf32>
    %4 = vector.broadcast %3 : vector<1x64xf32> to vector<8x64xf32>
    %5 = arith.addf %2, %4 : vector<8x64xf32>
    %cst_5 = arith.constant 0.000000e+00 : f32
    %6 = vector.broadcast %cst_5 : f32 to vector<8x64xf32>
    %7 = arith.maximumf %5, %6 : vector<8x64xf32>
    %8 = arith.truncf %7 : vector<8x64xf32> to vector<8x64xbf16>
    %c0_6 = arith.constant 0 : index
    %c0_7 = arith.constant 0 : index
    %9 = vector.load %arg4[%c0_6, %c0_7] : memref<64x32xbf16, #tpu.memory_space<vmem>>, vector<64x32xbf16>
    %cst_8 = arith.constant dense<0.000000e+00> : vector<8x32xf32>
    %10 = tpu.matmul %8, %9, %cst_8 {dimension_numbers = #tpu.dot_dimension_numbers<[1], [0], [0], [1], [0, 0, 1, 1], [], []>} : vector<8x64xbf16>, vector<64x32xbf16>, vector<8x32xf32> -> vector<8x32xf32>
    %c0_9 = arith.constant 0 : index
    %c0_10 = arith.constant 0 : index
    %11 = vector.load %arg5[%c0_9, %c0_10] : memref<1x32xf32, #tpu.memory_space<vmem>>, vector<1x32xf32>
    %12 = vector.broadcast %11 : vector<1x32xf32> to vector<8x32xf32>
    %13 = arith.addf %10, %12 : vector<8x32xf32>
    %cst_11 = arith.constant 0.000000e+00 : f32
    %14 = vector.broadcast %cst_11 : f32 to vector<8x32xf32>
    %15 = arith.cmpf ogt, %13, %14 : vector<8x32xf32>
    %cst_12 = arith.constant 0.00999999977 : f32
    %16 = vector.broadcast %cst_12 : f32 to vector<8x32xf32>
    %17 = arith.mulf %16, %13 : vector<8x32xf32>
    %18 = arith.select %15, %13, %17 : vector<8x32xi1>, vector<8x32xf32>
    %19 = arith.truncf %18 : vector<8x32xf32> to vector<8x32xbf16>
    %c0_13 = arith.constant 0 : index
    %c0_14 = arith.constant 0 : index
    %20 = vector.load %arg6[%c0_13, %c0_14] : memref<32x5xbf16, #tpu.memory_space<vmem>>, vector<32x5xbf16>
    %cst_15 = arith.constant dense<0.000000e+00> : vector<8x5xf32>
    %21 = tpu.matmul %19, %20, %cst_15 {dimension_numbers = #tpu.dot_dimension_numbers<[1], [0], [0], [1], [0, 0, 1, 1], [], []>} : vector<8x32xbf16>, vector<32x5xbf16>, vector<8x5xf32> -> vector<8x5xf32>
    %c0_16 = arith.constant 0 : index
    %c0_17 = arith.constant 0 : index
    %22 = vector.load %arg7[%c0_16, %c0_17] : memref<1x5xf32, #tpu.memory_space<vmem>>, vector<1x5xf32>
    %23 = vector.broadcast %22 : vector<1x5xf32> to vector<8x5xf32>
    %24 = arith.addf %21, %23 : vector<8x5xf32>
    %cst_18 = arith.constant dense<0xFF800000> : vector<8xf32>
    %25 = vector.multi_reduction <maximumf>, %24, %cst_18 [1] : vector<8x5xf32> to vector<8xf32>
    %26 = vector.shape_cast %25 : vector<8xf32> to vector<8x1xf32>
    %27 = vector.broadcast %26 : vector<8x1xf32> to vector<8x5xf32>
    %28 = arith.subf %24, %27 : vector<8x5xf32>
    %29 = math.exp %28 : vector<8x5xf32>
    %cst_19 = arith.constant dense<0.000000e+00> : vector<8xf32>
    %30 = vector.multi_reduction <add>, %29, %cst_19 [1] : vector<8x5xf32> to vector<8xf32>
    %31 = vector.shape_cast %30 : vector<8xf32> to vector<8x1xf32>
    %32 = math.log %31 : vector<8x1xf32>
    %33 = vector.broadcast %32 : vector<8x1xf32> to vector<8x5xf32>
    %34 = arith.subf %28, %33 : vector<8x5xf32>
    %c0_20 = arith.constant 0 : index
    %c0_21 = arith.constant 0 : index
    %35 = vector.load %arg8[%c0_20, %c0_21] : memref<8x5xf32, #tpu.memory_space<vmem>>, vector<8x5xf32>
    tpu.vector_store %arg8[%c0_20, %c0_21], %34 {strides = array<i32>} : memref<8x5xf32, #tpu.memory_space<vmem>>, vector<8x5xf32>,
    return
  }
  func.func @transform_0(%arg0: i32) -> (i32, i32) {
    %c0_i32 = arith.constant 0 : i32
    %c0_i32_0 = arith.constant 0 : i32
    return %arg0, %c0_i32 : i32, i32
  }
  func.func @transform_1(%arg0: i32) -> (i32, i32) {
    %c0_i32 = arith.constant 0 : i32
    %c0_i32_0 = arith.constant 0 : i32
    %c0_i32_1 = arith.constant 0 : i32
    return %c0_i32, %c0_i32_0 : i32, i32
  }
  func.func @transform_2(%arg0: i32) -> (i32, i32) {
    %c0_i32 = arith.constant 0 : i32
    %c0_i32_0 = arith.constant 0 : i32
    %c0_i32_1 = arith.constant 0 : i32
    return %c0_i32, %c0_i32_0 : i32, i32
  }
  func.func @transform_3(%arg0: i32) -> (i32, i32) {
    %c0_i32 = arith.constant 0 : i32
    %c0_i32_0 = arith.constant 0 : i32
    %c0_i32_1 = arith.constant 0 : i32
    return %c0_i32, %c0_i32_0 : i32, i32
  }
  func.func @transform_4(%arg0: i32) -> (i32, i32) {
    %c0_i32 = arith.constant 0 : i32
    %c0_i32_0 = arith.constant 0 : i32
    %c0_i32_1 = arith.constant 0 : i32
    return %c0_i32, %c0_i32_0 : i32, i32
  }
  func.func @transform_5(%arg0: i32) -> (i32, i32) {
    %c0_i32 = arith.constant 0 : i32
    %c0_i32_0 = arith.constant 0 : i32
    %c0_i32_1 = arith.constant 0 : i32
    return %c0_i32, %c0_i32_0 : i32, i32
  }
  func.func @transform_6(%arg0: i32) -> (i32, i32) {
    %c0_i32 = arith.constant 0 : i32
    %c0_i32_0 = arith.constant 0 : i32
    %c0_i32_1 = arith.constant 0 : i32
    return %c0_i32, %c0_i32_0 : i32, i32
  }
  func.func @transform_7(%arg0: i32) -> (i32, i32) {
    %c0_i32 = arith.constant 0 : i32
    %c0_i32_0 = arith.constant 0 : i32
    return %arg0, %c0_i32 : i32, i32
  }
}

</mosaic_0001>

<llo_original>
// kernel: tpu_custom_call.1
$region0: #{tpu_custom_call.1}
  #allocation0 [shape = 'u32[]', space=smem, size = 0x4, offset = 0x4, fixed_abs, tag = 'smem constant byte address 0x4 - core index']
  #allocation1 [shape = 'u32[72,128]{1,0:T(1,128)}', space=vmem, size = 0x9000, scoped, tag = 'internal scratch']
  %s0 = inlined_call_operand.vmem [shape: bf16[16,32], index: 0, kind: input, shape index: {}]
  %s1 = inlined_call_operand.vmem [shape: bf16[32,64], index: 1, kind: input, shape index: {}]
  %s2 = inlined_call_operand.vmem [shape: f32[1,64], index: 2, kind: input, shape index: {}]
  %s3 = inlined_call_operand.vmem [shape: bf16[64,32], index: 3, kind: input, shape index: {}]
  %s4 = inlined_call_operand.vmem [shape: f32[1,32], index: 4, kind: input, shape index: {}]
  %s5 = inlined_call_operand.vmem [shape: bf16[32,5], index: 5, kind: input, shape index: {}]
  %s6 = inlined_call_operand.vmem [shape: f32[1,5], index: 6, kind: input, shape index: {}]
  %s7 = inlined_call_operand.vmem [shape: f32[16,5], index: 7, kind: output, shape index: {}]
  %s8 = sld [smem:[#allocation0]]
  $region61: #{tpu_custom_call.1} parent=0
    _
  %s10 = ssub.s32 1, %s8
  %s11 = scalar_select 0, %s10, %s8
  loop: start=0, step=1, limit=4
  $region2: #{tpu_custom_call.1} parent=0 // loop_pre_header
    _
  $region3: #{tpu_custom_call.1} parent=0 // loop_header
    %s13 = sphi 0, %s17
    %p14 = scmp.ge.s32.totalorder %s13, 4
    %s23 = sphi 0, %s25
    %s26 = sphi 0, %s23
    %s27 = sphi 0, %s26
    %s43 = sphi 0, %s27
    %s47 = sphi 0, %s47
    %s49 = sphi 0, %s47
    %s50 = sphi 0, %s49
    %s64 = sphi 0, %s50
    %s68 = sphi 0, %s68
    %s70 = sphi 0, %s68
    %s71 = sphi 0, %s70
    %s85 = sphi 0, %s71
    %s89 = sphi 0, %s89
    %s91 = sphi 0, %s89
    %s92 = sphi 0, %s91
    %s106 = sphi 0, %s92
    %s110 = sphi 0, %s110
    %s112 = sphi 0, %s110
    %s113 = sphi 0, %s112
    %s127 = sphi 0, %s113
    %s131 = sphi 0, %s131
    %s133 = sphi 0, %s131
    %s134 = sphi 0, %s133
    %s148 = sphi 0, %s134
    %s152 = sphi 0, %s152
    %s154 = sphi 0, %s152
    %s155 = sphi 0, %s154
    %s169 = sphi 0, %s155
    %s175 = sphi 0, %s177
    %s178 = sphi 0, %s175
    %s179 = sphi 0, %s178
    %s195 = sphi 0, %s179
  $region4: #{tpu_custom_call.1} parent=0 // loop_header_branch
    %16 = sbr.rel (%p14) target = $region8
  $region5: #{tpu_custom_call.1} parent=0 // loop_body
    %s18 = ssub.s32 %s13, 1
    %s19 = ssub.s32 %s13, 2
    %s20 = sadd.s32 %s13, 1
    %s21 = ssub.s32 %s13, %s20
    %p22 = scmp.eq.s32.totalorder %s21, 0
    %s24 = sadd.s32 %s23, 1
    %s25 = scalar_select %p22, %s23, %s24
    %p28 = pneg %p22
    %p29 = scmp.eq.s32.totalorder %s13, 1
    %p30 = por %p28, %p29
    %p31 = scmp.ne.s32.totalorder %s23, %s26
    %p32 = scmp.eq.s32.totalorder %s13, 0
    %p33 = por %p31, %p32
    %p34 = scmp.ne.s32.totalorder %s23, %s26
    %p35 = scmp.eq.s32.totalorder %s18, 1
    %p36 = por %p34, %p35
    %p37 = scmp.ne.s32.totalorder %s26, %s27
    %p38 = scmp.eq.s32.totalorder %s18, 0
    %p39 = por %p37, %p38
    %p40 = scmp.ne.s32.totalorder %s26, %s27
    %p41 = scmp.eq.s32.totalorder %s19, 1
    %p42 = por %p40, %p41
    %p44 = scmp.ne.s32.totalorder %s27, %s43
    %p45 = scmp.eq.s32.totalorder %s19, 0
    %p46 = por %p44, %p45
    %s48 = sadd.s32 %s47, 1
    %p51 = scmp.eq.s32.totalorder %s13, 1
    %p52 = scmp.ne.s32.totalorder %s47, %s49
    %p53 = scmp.eq.s32.totalorder %s13, 0
    %p54 = por %p52, %p53
    %p55 = scmp.ne.s32.totalorder %s47, %s49
    %p56 = scmp.eq.s32.totalorder %s18, 1
    %p57 = por %p55, %p56
    %p58 = scmp.ne.s32.totalorder %s49, %s50
    %p59 = scmp.eq.s32.totalorder %s18, 0
    %p60 = por %p58, %p59
    %p61 = scmp.ne.s32.totalorder %s49, %s50
    %p62 = scmp.eq.s32.totalorder %s19, 1
    %p63 = por %p61, %p62
    %p65 = scmp.ne.s32.totalorder %s50, %s64
    %p66 = scmp.eq.s32.totalorder %s19, 0
    %p67 = por %p65, %p66
    %s69 = sadd.s32 %s68, 1
    %p72 = scmp.eq.s32.totalorder %s13, 1
    %p73 = scmp.ne.s32.totalorder %s68, %s70
    %p74 = scmp.eq.s32.totalorder %s13, 0
    %p75 = por %p73, %p74
    %p76 = scmp.ne.s32.totalorder %s68, %s70
    %p77 = scmp.eq.s32.totalorder %s18, 1
    %p78 = por %p76, %p77
    %p79 = scmp.ne.s32.totalorder %s70, %s71
    %p80 = scmp.eq.s32.totalorder %s18, 0
    %p81 = por %p79, %p80
    %p82 = scmp.ne.s32.totalorder %s70, %s71
    %p83 = scmp.eq.s32.totalorder %s19, 1
    %p84 = por %p82, %p83
    %p86 = scmp.ne.s32.totalorder %s71, %s85
    %p87 = scmp.eq.s32.totalorder %s19, 0
    %p88 = por %p86, %p87
    %s90 = sadd.s32 %s89, 1
    %p93 = scmp.eq.s32.totalorder %s13, 1
    %p94 = scmp.ne.s32.totalorder %s89, %s91
    %p95 = scmp.eq.s32.totalorder %s13, 0
    %p96 = por %p94, %p95
    %p97 = scmp.ne.s32.totalorder %s89, %s91
    %p98 = scmp.eq.s32.totalorder %s18, 1
    %p99 = por %p97, %p98
    %p100 = scmp.ne.s32.totalorder %s91, %s92
    %p101 = scmp.eq.s32.totalorder %s18, 0
    %p102 = por %p100, %p101
    %p103 = scmp.ne.s32.totalorder %s91, %s92
    %p104 = scmp.eq.s32.totalorder %s19, 1
    %p105 = por %p103, %p104
    %p107 = scmp.ne.s32.totalorder %s92, %s106
    %p108 = scmp.eq.s32.totalorder %s19, 0
    %p109 = por %p107, %p108
    %s111 = sadd.s32 %s110, 1
    %p114 = scmp.eq.s32.totalorder %s13, 1
    %p115 = scmp.ne.s32.totalorder %s110, %s112
    %p116 = scmp.eq.s32.totalorder %s13, 0
    %p117 = por %p115, %p116
    %p118 = scmp.ne.s32.totalorder %s110, %s112
    %p119 = scmp.eq.s32.totalorder %s18, 1
    %p120 = por %p118, %p119
    %p121 = scmp.ne.s32.totalorder %s112, %s113
    %p122 = scmp.eq.s32.totalorder %s18, 0
    %p123 = por %p121, %p122
    %p124 = scmp.ne.s32.totalorder %s112, %s113
    %p125 = scmp.eq.s32.totalorder %s19, 1
    %p126 = por %p124, %p125
    %p128 = scmp.ne.s32.totalorder %s113, %s127
    %p129 = scmp.eq.s32.totalorder %s19, 0
    %p130 = por %p128, %p129
    %s132 = sadd.s32 %s131, 1
    %p135 = scmp.eq.s32.totalorder %s13, 1
    %p136 = scmp.ne.s32.totalorder %s131, %s133
    %p137 = scmp.eq.s32.totalorder %s13, 0
    %p138 = por %p136, %p137
    %p139 = scmp.ne.s32.totalorder %s131, %s133
    %p140 = scmp.eq.s32.totalorder %s18, 1
    %p141 = por %p139, %p140
    %p142 = scmp.ne.s32.totalorder %s133, %s134
    %p143 = scmp.eq.s32.totalorder %s18, 0
    %p144 = por %p142, %p143
    %p145 = scmp.ne.s32.totalorder %s133, %s134
    %p146 = scmp.eq.s32.totalorder %s19, 1
    %p147 = por %p145, %p146
    %p149 = scmp.ne.s32.totalorder %s134, %s148
    %p150 = scmp.eq.s32.totalorder %s19, 0
    %p151 = por %p149, %p150
    %s153 = sadd.s32 %s152, 1
    %p156 = scmp.eq.s32.totalorder %s13, 1
    %p157 = scmp.ne.s32.totalorder %s152, %s154
    %p158 = scmp.eq.s32.totalorder %s13, 0
    %p159 = por %p157, %p158
    %p160 = scmp.ne.s32.totalorder %s152, %s154
    %p161 = scmp.eq.s32.totalorder %s18, 1
    %p162 = por %p160, %p161
    %p163 = scmp.ne.s32.totalorder %s154, %s155
    %p164 = scmp.eq.s32.totalorder %s18, 0
    %p165 = por %p163, %p164
    %p166 = scmp.ne.s32.totalorder %s154, %s155
    %p167 = scmp.eq.s32.totalorder %s19, 1
    %p168 = por %p166, %p167
    %p170 = scmp.ne.s32.totalorder %s155, %s169
    %p171 = scmp.eq.s32.totalorder %s19, 0
    %p172 = por %p170, %p171
    %s173 = ssub.s32 %s13, %s20
    %p174 = scmp.eq.s32.totalorder %s173, 0
    %s176 = sadd.s32 %s175, 1
    %s177 = scalar_select %p174, %s175, %s176
    %p180 = pneg %p174
    %p181 = scmp.eq.s32.totalorder %s13, 1
    %p182 = por %p180, %p181
    %p183 = scmp.ne.s32.totalorder %s175, %s178
    %p184 = scmp.eq.s32.totalorder %s13, 0
    %p185 = por %p183, %p184
    %p186 = scmp.ne.s32.totalorder %s175, %s178
    %p187 = scmp.eq.s32.totalorder %s18, 1
    %p188 = por %p186, %p187
    %p189 = scmp.ne.s32.totalorder %s178, %s179
    %p190 = scmp.eq.s32.totalorder %s18, 0
    %p191 = por %p189, %p190
    %p192 = scmp.ne.s32.totalorder %s178, %s179
    %p193 = scmp.eq.s32.totalorder %s19, 1
    %p194 = por %p192, %p193
    %p196 = scmp.ne.s32.totalorder %s179, %s195
    %p197 = scmp.eq.s32.totalorder %s19, 0
    %p198 = por %p196, %p197
    %p199 = scmp.le.s32.totalorder 1, %s13
    %p200 = scmp.lt.s32.totalorder %s13, 3
    %p201 = pnand %p199, %p200
    %p202 = pneg %p201
    // Predicated region
    $region9: #{tpu_custom_call.1} parent=5 // pred_check
      _
    $region10: #{tpu_custom_call.1} parent=5 // pred_check_branch
      %204 = sbr.rel (%p201) target = $region12
    $region11: #{tpu_custom_call.1} parent=5 // pred_region
      %s205 = ssub.s32 %s13, 1
      // Predicated region
      $region13: #{tpu_custom_call.1} parent=11 // pred_check
        %p206 = pneg %p60
      $region14: #{tpu_custom_call.1} parent=11 // pred_check_branch
        %208 = sbr.rel (%p206) target = $region16
      $region15: #{tpu_custom_call.1} parent=11 // pred_region
        _
      $region16: #{tpu_custom_call.1} parent=11 // pred_fallthru
        _
      // Predicated region
      $region17: #{tpu_custom_call.1} parent=11 // pred_check
        %p209 = pneg %p81
      $region18: #{tpu_custom_call.1} parent=11 // pred_check_branch
        %211 = sbr.rel (%p209) target = $region20
      $region19: #{tpu_custom_call.1} parent=11 // pred_region
        _
      $region20: #{tpu_custom_call.1} parent=11 // pred_fallthru
        _
      // Predicated region
      $region21: #{tpu_custom_call.1} parent=11 // pred_check
        %p212 = pneg %p102
      $region22: #{tpu_custom_call.1} parent=11 // pred_check_branch
        %214 = sbr.rel (%p212) target = $region24
      $region23: #{tpu_custom_call.1} parent=11 // pred_region
        _
      $region24: #{tpu_custom_call.1} parent=11 // pred_fallthru
        _
      // Predicated region
      $region25: #{tpu_custom_call.1} parent=11 // pred_check
        %p215 = pneg %p123
      $region26: #{tpu_custom_call.1} parent=11 // pred_check_branch
        %217 = sbr.rel (%p215) target = $region28
      $region27: #{tpu_custom_call.1} parent=11 // pred_region
        _
      $region28: #{tpu_custom_call.1} parent=11 // pred_fallthru
        _
      // Predicated region
      $region29: #{tpu_custom_call.1} parent=11 // pred_check
        %p218 = pneg %p144
      $region30: #{tpu_custom_call.1} parent=11 // pred_check_branch
        %220 = sbr.rel (%p218) target = $region32
      $region31: #{tpu_custom_call.1} parent=11 // pred_region
        _
      $region32: #{tpu_custom_call.1} parent=11 // pred_fallthru
        _
      // Predicated region
      $region33: #{tpu_custom_call.1} parent=11 // pred_check
        %p221 = pneg %p165
      $region34: #{tpu_custom_call.1} parent=11 // pred_check_branch
        %223 = sbr.rel (%p221) target = $region36
      $region35: #{tpu_custom_call.1} parent=11 // pred_region
        _
      $region36: #{tpu_custom_call.1} parent=11 // pred_fallthru
        _
    $region12: #{tpu_custom_call.1} parent=5 // pred_fallthru
      _
    %p224 = scmp.lt.s32.totalorder %s13, 2
    // Predicated region
    $region37: #{tpu_custom_call.1} parent=5 // pred_check
      %p225 = pneg %p224
    $region38: #{tpu_custom_call.1} parent=5 // pred_check_branch
      %227 = sbr.rel (%p225) target = $region40
    $region39: #{tpu_custom_call.1} parent=5 // pred_region
      // Predicated region
      $region41: #{tpu_custom_call.1} parent=39 // pred_check
        %p228 = pneg %p33
      $region42: #{tpu_custom_call.1} parent=39 // pred_check_branch
        %230 = sbr.rel (%p228) target = $region44
      $region43: #{tpu_custom_call.1} parent=39 // pred_region
        %p231 = scmp.lt.s32.totalorder %s13, 1
        %s232 = scalar_select %p231, %s13, 1
        %s233 = smul.addr %s232, 4
        %s234 = scalar_lea.vmem %s0, %s233
      $region44: #{tpu_custom_call.1} parent=39 // pred_fallthru
        _
    $region40: #{tpu_custom_call.1} parent=5 // pred_fallthru
      _
    %p235 = scmp.le.s32.totalorder 1, %s13
    %p236 = scmp.lt.s32.totalorder %s13, 3
    %p237 = pnand %p235, %p236
    %p238 = pneg %p237
    // Predicated region
    $region45: #{tpu_custom_call.1} parent=5 // pred_check
      _
    $region46: #{tpu_custom_call.1} parent=5 // pred_check_branch
      %240 = sbr.rel (%p237) target = $region48
    $region47: #{tpu_custom_call.1} parent=5 // pred_region
      %s241 = ssub.s32 %s13, 1
      %p242 = scmp.lt.s32.totalorder %s18, 1
      %s243 = scalar_select %p242, %s18, 1
      %s244 = smul.addr %s243, 4
      %s245 = scalar_lea.vmem %s0, %s244
      %p246 = pneg %p39
      %p247 = pneg %p36
      %p248 = pneg %p60
      %p249 = pneg %p57
      %p250 = pneg %p81
      %p251 = pneg %p78
      %p252 = pneg %p102
      %p253 = pneg %p99
      %p254 = pneg %p123
      %p255 = pneg %p120
      %p256 = pneg %p144
      %p257 = pneg %p141
      %p258 = pneg %p165
      %p259 = pneg %p162
      %p260 = pneg %p191
      %p261 = pneg %p188
      %p262 = scmp.lt.s32.totalorder %s18, 1
      %s263 = scalar_select %p262, %s18, 1
      %s264 = smul.addr %s263, 8
      %s265 = scalar_lea.vmem %s7, %s264
      %p266 = scmp.lt.s32.totalorder %s18, 1
      %s267 = scalar_select %p266, %s18, 1
      %s268 = smul.addr %s267, 4
      %s269 = scalar_lea.vmem %s0, %s268
      %p270 = scmp.lt.s32.totalorder %s18, 1
      %s271 = scalar_select %p270, %s18, 1
      %s272 = smul.addr %s271, 8
      %s273 = scalar_lea.vmem %s7, %s272
      %v275 = vld [vmem:[%s269] sm:$0xf]
      %v276 = vld [vmem:[%s1] sm:$0xf]
      %v277 = vld [vmem:[%s1 + $0x4] sm:$0xf]
      %v278 = vld [vmem:[%s1 + $0x8] sm:$0xf]
      %v279 = vld [vmem:[%s1 + $0xc] sm:$0xf]
      %v280 = vld [vmem:[%s2] sm:$0x1]
      %v282 = vperm.slane %v280, 0
      %v288 = vunpack.c.l.b16 %v276
      %v289 = vunpack.c.l.b16 %v277
      %v290 = vunpack.c.l.b16 %v278
      %v291 = vunpack.c.l.b16 %v279
      %v292 = vpack.c.b16 %v289, %v288
      %v293 = vpack.c.b16 %v291, %v290
      %vm296 = vcmask 261120
      %v298 = vsel %vm296, %v275, 0
      %300 = vmatpush.bf16.msra.mxu0 0
      %301 = vmatpush.bf16.msra.mxu0 0
      %302 = vmatpush.bf16.msra.mxu0 0
      %303 = vmatpush.bf16.msra.mxu0 0
      %304 = vmatpush.bf16.msra.mxu0 0
      %305 = vmatpush.bf16.msra.mxu0 0
      %306 = vmatpush.bf16.msra.mxu0 %v293
      %307 = vmatpush.bf16.msra.mxu0 %v292
      %308 = vmatmul.bf16.gmra.mxu0 %v298
      %v309 = vpop.f32.mrf.mxu0
      %v310 = vadd.f32 %v282, %v309
      %v311 = vpop.f32.mrf.mxu0
      %312 = vdwg.mxu0
      %v313 = vmax.f32 %v310, 0.0
      %v314 = vpack.c.bf16 %v313, %v313
      %v315 = vld [vmem:[%s3] sm:$0xf]
      %v316 = vld [vmem:[%s3 + $0x4] sm:$0xf]
      %v317 = vld [vmem:[%s3 + $0x8] sm:$0xf]
      %v318 = vld [vmem:[%s3 + $0xc] sm:$0xf]
      %v319 = vld [vmem:[%s3 + $0x10] sm:$0xf]
      %v320 = vld [vmem:[%s3 + $0x14] sm:$0xf]
      %v321 = vld [vmem:[%s3 + $0x18] sm:$0xf]
      %v322 = vld [vmem:[%s3 + $0x1c] sm:$0xf]
      %v323 = vld [vmem:[%s4] sm:$0x1]
      %v325 = vperm.slane %v323, 0
      %v335 = vunpack.c.l.b16 %v315
      %v336 = vunpack.c.l.b16 %v316
      %v337 = vunpack.c.l.b16 %v317
      %v338 = vunpack.c.l.b16 %v318
      %v339 = vunpack.c.l.b16 %v319
      %v340 = vunpack.c.l.b16 %v320
      %v341 = vunpack.c.l.b16 %v321
      %v342 = vunpack.c.l.b16 %v322
      %v343 = vpack.c.b16 %v336, %v335
      %v344 = vpack.c.b16 %v338, %v337
      %v345 = vpack.c.b16 %v340, %v339
      %v346 = vpack.c.b16 %v342, %v341
      %vm351 = vcmask 523264
      %v353 = vsel %vm351, %v314, 0
      %355 = vmatpush.bf16.msra.mxu0 0
      %356 = vmatpush.bf16.msra.mxu0 0
      %357 = vmatpush.bf16.msra.mxu0 0
      %358 = vmatpush.bf16.msra.mxu0 0
      %359 = vmatpush.bf16.msra.mxu0 %v346
      %360 = vmatpush.bf16.msra.mxu0 %v345
      %361 = vmatpush.bf16.msra.mxu0 %v344
      %362 = vmatpush.bf16.msra.mxu0 %v343
      %363 = vmatmul.bf16.gmra.mxu0 %v353
      %v364 = vpop.f32.mrf.mxu0
      %v365 = vadd.f32 %v325, %v364
      %v366 = vpop.f32.mrf.mxu0
      %367 = vdwg.mxu0
      %vm368 = vcmp.gt.f32.partialorder %v365, 0.0
      %v369 = vmul.f32 %v365, 0.01
      %v370 = vsel %vm368, %v365, %v369
      %v371 = vpack.c.bf16 %v370, %v370
      %v372 = vld [vmem:[%s5] sm:$0xf]
      %v373 = vld [vmem:[%s5 + $0x4] sm:$0xf]
      %v374 = vld [vmem:[%s5 + $0x8] sm:$0xf]
      %v375 = vld [vmem:[%s5 + $0xc] sm:$0xf]
      %v376 = vld [vmem:[%s6] sm:$0x1]
      %v378 = vperm.slane %v376, 0
      %v384 = vunpack.c.l.b16 %v372
      %v385 = vunpack.c.l.b16 %v373
      %v386 = vunpack.c.l.b16 %v374
      %v387 = vunpack.c.l.b16 %v375
      %v388 = vpack.c.b16 %v385, %v384
      %v389 = vpack.c.b16 %v387, %v386
      %v393 = vsel %vm296, %v371, 0
      %395 = vmatpush.bf16.msra.mxu0 0
      %396 = vmatpush.bf16.msra.mxu0 0
      %397 = vmatpush.bf16.msra.mxu0 0
      %398 = vmatpush.bf16.msra.mxu0 0
      %399 = vmatpush.bf16.msra.mxu0 0
      %400 = vmatpush.bf16.msra.mxu0 0
      %401 = vmatpush.bf16.msra.mxu0 %v389
      %402 = vmatpush.bf16.msra.mxu0 %v388
      %403 = vmatmul.bf16.gmra.mxu0 %v393
      %v404 = vpop.f32.mrf.mxu0
      %v405 = vadd.f32 %v378, %v404
      %v406 = vpop.f32.mrf.mxu0
      %407 = vdwg.mxu0
      %vm408 = vcmask 39936
      %v409 = vsel %vm408, %v405, -inf
      %410 = vmax.xlane.f32.xlu0 %v409
      %v411 = vpop.xlane.xlu0 %410
      %v412 = vsub.f32 %v405, %v411
      %v413 = vmul.f32 %v412, 1.442695
      %v414 = vpow.pop %v413
      %v415 = vsel %vm408, %v414, 0.0
      %416 = vadd.xlane.f32.xlu0 %v415
      %v417 = vpop.xlane.xlu0 %416
      %v418 = vlog2.pop %v417
      %v419 = vmul.f32 %v418, 0.6931472
      %v420 = vsub.f32 %v412, %v419
      %421 = vst.msk [vmem:[%s273] sm:$0xff] %vm408, %v420
      %p422 = scmp.lt.s32.totalorder %s18, 1
      %s423 = scalar_select %p422, %s18, 1
      %s424 = smul.addr %s423, 8
      %s425 = scalar_lea.vmem %s7, %s424
      // Predicated region
      $region49: #{tpu_custom_call.1} parent=47 // pred_check
        %p426 = pneg %p188
      $region50: #{tpu_custom_call.1} parent=47 // pred_check_branch
        %428 = sbr.rel (%p426) target = $region52
      $region51: #{tpu_custom_call.1} parent=47 // pred_region
        _
      $region52: #{tpu_custom_call.1} parent=47 // pred_fallthru
        _
    $region48: #{tpu_custom_call.1} parent=5 // pred_fallthru
      _
    %p429 = scmp.le.s32.totalorder 2, %s13
    // Predicated region
    $region53: #{tpu_custom_call.1} parent=5 // pred_check
      %p430 = pneg %p429
    $region54: #{tpu_custom_call.1} parent=5 // pred_check_branch
      %432 = sbr.rel (%p430) target = $region56
    $region55: #{tpu_custom_call.1} parent=5 // pred_region
      %s433 = ssub.s32 %s13, 2
      // Predicated region
      $region57: #{tpu_custom_call.1} parent=55 // pred_check
        %p434 = pneg %p194
      $region58: #{tpu_custom_call.1} parent=55 // pred_check_branch
        %436 = sbr.rel (%p434) target = $region60
      $region59: #{tpu_custom_call.1} parent=55 // pred_region
        %p437 = scmp.lt.s32.totalorder %s19, 1
        %s438 = scalar_select %p437, %s19, 1
        %s439 = smul.addr %s438, 8
        %s440 = scalar_lea.vmem %s7, %s439
      $region60: #{tpu_custom_call.1} parent=55 // pred_fallthru
        _
    $region56: #{tpu_custom_call.1} parent=5 // pred_fallthru
      _
  $region6: #{tpu_custom_call.1} parent=0 // loop_footer
    %s17 = sadd.s32 1, %s13
  $region7: #{tpu_custom_call.1} parent=0 // loop_footer_branch
    %12 = sbr.rel target = $region3
  $region8: #{tpu_custom_call.1} parent=0 // loop_exit
    _

</llo_original>
